<compile_context>
chip_gen: v7x
topology: tpu7x:2x2x1
jax: 0.10.0
libtpu: 0.0.40
codegen_flags: <defaults>
</compile_context>

<pallas_src>
import jax
import jax.numpy as jnp
from jax import lax
from jax.experimental import pallas as pl
from jax.experimental.pallas import tpu as pltpu


def _make_ta_kernel(H, W, C, TB):
    HW = H * W
    L = TB * HW  # lanes per grid step (TB whole images)

    def kernel(x_ref, p_ref, b_ref, out_ref):
        """
        x_ref  : (2C, L)  stacked [t; c], lane index = b*HW + y*W + x
        p_ref  : (2C, 19) params: col tap (0..8) = conv weight for out-chan 0,
                 col 9+tap = conv weight for out-chan 1, col 18 = [v_t; v_c]
        b_ref  : (2,)     conv bias (SMEM scalars)
        out_ref: (C, L)
        """
        x = x_ref[...].astype(jnp.float32)   # DMA native dtype, f32 compute (v5e-safe)
        P = p_ref[...]                       # single load; sliced in-register below

        # Per-lane (row, col) inside each image.  Power-of-two fast path
        # avoids the multi-op integer divide on the VPU.
        flat = lax.broadcasted_iota(jnp.int32, (1, L), 1)
        if (HW & (HW - 1)) == 0:
            hw = flat & (HW - 1)
        else:
            hw = flat % HW
        if (W & (W - 1)) == 0:
            row = hw >> (W.bit_length() - 1)
            col = hw & (W - 1)
        else:
            row = hw // W
            col = hw - row * W

        # 3x3 "same" conv: one roll + one mask per tap on the stacked input,
        # two per-channel weighted accumulations (one per conv output chan).
        wsum0 = jnp.zeros((2 * C, L), jnp.float32)
        wsum1 = jnp.zeros((2 * C, L), jnp.float32)
        for ky in range(3):
            for kx in range(3):
                dy, dx = ky - 1, kx - 1
                s = dy * W + dx
                tap = ky * 3 + kx
                if s == 0:
                    xs = x
                else:
                    conds = []
                    if dy == -1:
                        conds.append(row >= 1)
                    elif dy == 1:
                        conds.append(row < H - 1)
                    if dx == -1:
                        conds.append(col >= 1)
                    elif dx == 1:
                        conds.append(col < W - 1)
                    valid = conds[0]
                    for cnd in conds[1:]:
                        valid = valid & cnd
                    # out[p] = x[p + s] where valid; wrap / cross-image reads
                    # land only on masked positions.
                    xs = jnp.where(valid,
                                   pltpu.roll(x, shift=(-s) % L, axis=1),
                                   0.0)
                w0 = P[:, tap:tap + 1]          # (2C, 1) lane-broadcast weight
                w1 = P[:, 9 + tap:10 + tap]
                wsum0 = wsum0 + xs * w0
                wsum1 = wsum1 + xs * w1

        acc0 = jnp.sum(wsum0, axis=0, keepdims=True) + b_ref[0]   # (1, L)
        acc1 = jnp.sum(wsum1, axis=0, keepdims=True) + b_ref[1]
        a0 = jax.nn.sigmoid(acc0)
        a1 = jax.nn.sigmoid(acc1)

        v = P[:, 18:19]                        # (2C, 1) = [v_t; v_c]
        xv = x * v                             # (2C, L)
        out = a0 * xv[:C] + a1 * xv[C:]        # (C, L)
        out_ref[...] = out.astype(out_ref.dtype)

    return kernel


def _pick_tb(B, HW, C, itemsize, budget_bytes=8 << 20):
    """Largest number of whole images per grid step under a VMEM budget.

    Per-lane footprint: double-buffered x block + double-buffered out block
    (native dtype) + f32 live temps (~ x, xs, wsum0, wsum1, xv).
    Non-full lane blocks must stay 128-aligned.
    """
    per_lane = 2 * (2 * C) * itemsize + 2 * C * itemsize + 5 * (2 * C) * 4
    max_lanes = max(HW, budget_bytes // per_lane)
    candidates = [d for d in range(1, B + 1)
                  if B % d == 0 and d * HW <= max_lanes
                  and (d == B or (d * HW) % 128 == 0)]
    return max(candidates) if candidates else B


def ta_forward_nchw(t_nchw, c_nchw, w_oihw, bias, v_t, v_c):
    """Matches the PyTorch TA.forward: t, c are NCHW; output is NCHW."""
    B, C, H, W = t_nchw.shape
    HW = H * W
    dt = t_nchw.dtype

    # Stack t & c on the channel (sublane) axis and fold batch onto lanes:
    # x[i, b*HW + p] = (t if i < C else c)[b, i mod C, p]
    t2 = jnp.transpose(t_nchw.reshape(B, C, HW), (1, 0, 2)).reshape(C, B * HW)
    c2 = jnp.transpose(c_nchw.reshape(B, C, HW), (1, 0, 2)).reshape(C, B * HW)
    x = jnp.concatenate([t2, c2], axis=0)                       # (2C, B*HW)

    # Pack conv weights + [v_t; v_c] into one per-input-channel table:
    # params[i, o*9 + tap] = w_oihw[o, i, ky, kx], params[i, 18] = v[i].
    wp = jnp.transpose(w_oihw.reshape(2, 2 * C, 9), (1, 0, 2)).reshape(2 * C, 18)
    vcat = jnp.concatenate([v_t.reshape(C), v_c.reshape(C)]).reshape(2 * C, 1)
    params = jnp.concatenate([wp, vcat], axis=1).astype(jnp.float32)  # (2C, 19)
    bias_s = bias.reshape(2).astype(jnp.float32)                 # SMEM scalars

    tb = _pick_tb(B, HW, C, jnp.dtype(dt).itemsize)
    grid = (B // tb,)
    L = tb * HW

    out2 = pl.pallas_call(
        _make_ta_kernel(H, W, C, tb),
        out_shape=jax.ShapeDtypeStruct((C, B * HW), dt),
        grid_spec=pltpu.PrefetchScalarGridSpec(
            num_scalar_prefetch=0,
            grid=grid,                                           # batch groups
            in_specs=[
                pl.BlockSpec((2 * C, L), lambda g: (0, g)),
                # Invariant index_map -> params block stays VMEM-resident.
                pl.BlockSpec((2 * C, params.shape[1]), lambda g: (0, 0)),
                pl.BlockSpec(memory_space=pltpu.MemorySpace.SMEM),
            ],
            out_specs=pl.BlockSpec((C, L), lambda g: (0, g)),
        ),
        compiler_params=pltpu.CompilerParams(
            dimension_semantics=("parallel",),                   # megacore-shardable
            vmem_limit_bytes=32 * 1024 * 1024),                  # explicit, v7x-safe
    )(x, params, bias_s)

    out = jnp.transpose(out2.reshape(C, B, HW), (1, 0, 2)).reshape(B, C, H, W)
    return out


def _reference_nchw(t_nchw, c_nchw, w_oihw, bias, v_t, v_c):
    """Pure-JAX reference mirroring the PyTorch forward (NCHW)."""
    x = jnp.concatenate([t_nchw, c_nchw], axis=1)
    attmap = lax.conv_general_dilated(
        x, w_oihw, window_strides=(1, 1), padding=((1, 1), (1, 1)),
        dimension_numbers=("NCHW", "OIHW", "NCHW"))
    attmap = jax.nn.sigmoid(attmap + bias.reshape(1, 2, 1, 1))
    vt = v_t.reshape(1, -1, 1, 1)
    vc = v_c.reshape(1, -1, 1, 1)
    return attmap[:, 0:1] * t_nchw * vt + attmap[:, 1:2] * c_nchw * vc


if __name__ == "__main__":
    B, in_dim, H, W = 2, 4, 16, 16

    key = jax.random.PRNGKey(0)
    k1, k2, k3, k4, k5, k6 = jax.random.split(key, 6)

    # Deterministic parameter init (shapes from the module __init__).
    w_oihw = jax.random.normal(k1, (2, 2 * in_dim, 3, 3), jnp.float32) * 0.1
    bias = jax.random.normal(k2, (2,), jnp.float32) * 0.1
    v_t = jax.random.normal(k3, (1, in_dim, 1, 1), jnp.float32)
    v_c = jax.random.normal(k4, (1, in_dim, 1, 1), jnp.float32)

    # Example inputs (NCHW, as in PyTorch).
    t_nchw = jax.random.normal(k5, (B, in_dim, H, W), jnp.float32)
    c_nchw = jax.random.normal(k6, (B, in_dim, H, W), jnp.float32)

    out = ta_forward_nchw(t_nchw, c_nchw, w_oihw, bias, v_t, v_c)
    out = jax.block_until_ready(out)

    ref = _reference_nchw(t_nchw, c_nchw, w_oihw, bias, v_t, v_c)
    assert out.shape == (B, in_dim, H, W)
    assert jnp.allclose(out, ref, atol=1e-5, rtol=1e-5), "mismatch vs reference"

    print("KERNEL_OK")
</pallas_src>

<mosaic_0001>
module attributes {stable_mosaic.version = 11 : i64} {
  func.func @kernel(%arg0: i32, %arg1: memref<8x512xf32, #tpu.memory_space<vmem>>, %arg2: memref<8x19xf32, #tpu.memory_space<vmem>>, %arg3: memref<2xf32, #tpu.memory_space<smem>>, %arg4: memref<4x512xf32, #tpu.memory_space<vmem>>) attributes {dimension_semantics = [#tpu.dimension_semantics<parallel>], iteration_bounds = array<i64: 1>, scalar_prefetch = 0 : i64, scratch_operands = 0 : i64, tpu.core_type = #tpu.core_type<tc>, window_params = [{transform_indices = @transform_0, window_bounds = array<i64: 8, 512>}, {pipeline_mode = #tpu.pipeline_mode<synchronous>, transform_indices = @transform_1, window_bounds = array<i64: 8, 19>}, {transform_indices = @transform_2, window_bounds = array<i64: 2>}, {transform_indices = @transform_3, window_bounds = array<i64: 4, 512>}]} {
    %c0 = arith.constant 0 : index
    %c0_0 = arith.constant 0 : index
    %0 = vector.load %arg1[%c0, %c0_0] : memref<8x512xf32, #tpu.memory_space<vmem>>, vector<8x512xf32>
    %c0_1 = arith.constant 0 : index
    %c0_2 = arith.constant 0 : index
    %1 = vector.load %arg2[%c0_1, %c0_2] : memref<8x19xf32, #tpu.memory_space<vmem>>, vector<8x19xf32>
    %2 = tpu.iota {dimensions = array<i32: 1>} : vector<1x512xi32>
    %c255_i32 = arith.constant 255 : i32
    %3 = vector.broadcast %c255_i32 : i32 to vector<1x512xi32>
    %4 = arith.andi %2, %3 : vector<1x512xi32>
    %c4_i32 = arith.constant 4 : i32
    %5 = vector.broadcast %c4_i32 : i32 to vector<1x512xi32>
    %6 = arith.shrsi %4, %5 : vector<1x512xi32>
    %c15_i32 = arith.constant 15 : i32
    %7 = vector.broadcast %c15_i32 : i32 to vector<1x512xi32>
    %8 = arith.andi %4, %7 : vector<1x512xi32>
    %cst = arith.constant 0.000000e+00 : f32
    %9 = vector.broadcast %cst : f32 to vector<8x512xf32>
    %cst_3 = arith.constant 0.000000e+00 : f32
    %10 = vector.broadcast %cst_3 : f32 to vector<8x512xf32>
    %c1_i32 = arith.constant 1 : i32
    %11 = vector.broadcast %c1_i32 : i32 to vector<1x512xi32>
    %12 = arith.cmpi sge, %6, %11 : vector<1x512xi32>
    %c1_i32_4 = arith.constant 1 : i32
    %13 = vector.broadcast %c1_i32_4 : i32 to vector<1x512xi32>
    %14 = arith.cmpi sge, %8, %13 : vector<1x512xi32>
    %15 = arith.andi %12, %14 : vector<1x512xi1>
    %c17_i32 = arith.constant 17 : i32
    %16 = tpu.dynamic_rotate %0 by %c17_i32 dim 1 : vector<8x512xf32>, i32 -> vector<8x512xf32>
    %cst_5 = arith.constant 0.000000e+00 : f32
    %17 = vector.shape_cast %15 : vector<1x512xi1> to vector<1x512xi1>
    %18 = vector.broadcast %17 : vector<1x512xi1> to vector<8x512xi1>
    %19 = vector.broadcast %cst_5 : f32 to vector<8x512xf32>
    %20 = arith.select %18, %16, %19 : vector<8x512xi1>, vector<8x512xf32>
    %21 = vector.extract_strided_slice %1 {offsets = [0, 0], sizes = [8, 1], strides = [1, 1]} : vector<8x19xf32> to vector<8x1xf32>
    %22 = vector.extract_strided_slice %1 {offsets = [0, 9], sizes = [8, 1], strides = [1, 1]} : vector<8x19xf32> to vector<8x1xf32>
    %23 = vector.broadcast %21 : vector<8x1xf32> to vector<8x512xf32>
    %24 = arith.mulf %20, %23 : vector<8x512xf32>
    %25 = arith.addf %9, %24 : vector<8x512xf32>
    %26 = vector.broadcast %22 : vector<8x1xf32> to vector<8x512xf32>
    %27 = arith.mulf %20, %26 : vector<8x512xf32>
    %28 = arith.addf %10, %27 : vector<8x512xf32>
    %c1_i32_6 = arith.constant 1 : i32
    %29 = vector.broadcast %c1_i32_6 : i32 to vector<1x512xi32>
    %30 = arith.cmpi sge, %6, %29 : vector<1x512xi32>
    %c16_i32 = arith.constant 16 : i32
    %31 = tpu.dynamic_rotate %0 by %c16_i32 dim 1 : vector<8x512xf32>, i32 -> vector<8x512xf32>
    %cst_7 = arith.constant 0.000000e+00 : f32
    %32 = vector.shape_cast %30 : vector<1x512xi1> to vector<1x512xi1>
    %33 = vector.broadcast %32 : vector<1x512xi1> to vector<8x512xi1>
    %34 = vector.broadcast %cst_7 : f32 to vector<8x512xf32>
    %35 = arith.select %33, %31, %34 : vector<8x512xi1>, vector<8x512xf32>
    %36 = vector.extract_strided_slice %1 {offsets = [0, 1], sizes = [8, 1], strides = [1, 1]} : vector<8x19xf32> to vector<8x1xf32>
    %37 = vector.extract_strided_slice %1 {offsets = [0, 10], sizes = [8, 1], strides = [1, 1]} : vector<8x19xf32> to vector<8x1xf32>
    %38 = vector.broadcast %36 : vector<8x1xf32> to vector<8x512xf32>
    %39 = arith.mulf %35, %38 : vector<8x512xf32>
    %40 = arith.addf %25, %39 : vector<8x512xf32>
    %41 = vector.broadcast %37 : vector<8x1xf32> to vector<8x512xf32>
    %42 = arith.mulf %35, %41 : vector<8x512xf32>
    %43 = arith.addf %28, %42 : vector<8x512xf32>
    %c1_i32_8 = arith.constant 1 : i32
    %44 = vector.broadcast %c1_i32_8 : i32 to vector<1x512xi32>
    %45 = arith.cmpi sge, %6, %44 : vector<1x512xi32>
    %c15_i32_9 = arith.constant 15 : i32
    %46 = vector.broadcast %c15_i32_9 : i32 to vector<1x512xi32>
    %47 = arith.cmpi slt, %8, %46 : vector<1x512xi32>
    %48 = arith.andi %45, %47 : vector<1x512xi1>
    %c15_i32_10 = arith.constant 15 : i32
    %49 = tpu.dynamic_rotate %0 by %c15_i32_10 dim 1 : vector<8x512xf32>, i32 -> vector<8x512xf32>
    %cst_11 = arith.constant 0.000000e+00 : f32
    %50 = vector.shape_cast %48 : vector<1x512xi1> to vector<1x512xi1>
    %51 = vector.broadcast %50 : vector<1x512xi1> to vector<8x512xi1>
    %52 = vector.broadcast %cst_11 : f32 to vector<8x512xf32>
    %53 = arith.select %51, %49, %52 : vector<8x512xi1>, vector<8x512xf32>
    %54 = vector.extract_strided_slice %1 {offsets = [0, 2], sizes = [8, 1], strides = [1, 1]} : vector<8x19xf32> to vector<8x1xf32>
    %55 = vector.extract_strided_slice %1 {offsets = [0, 11], sizes = [8, 1], strides = [1, 1]} : vector<8x19xf32> to vector<8x1xf32>
    %56 = vector.broadcast %54 : vector<8x1xf32> to vector<8x512xf32>
    %57 = arith.mulf %53, %56 : vector<8x512xf32>
    %58 = arith.addf %40, %57 : vector<8x512xf32>
    %59 = vector.broadcast %55 : vector<8x1xf32> to vector<8x512xf32>
    %60 = arith.mulf %53, %59 : vector<8x512xf32>
    %61 = arith.addf %43, %60 : vector<8x512xf32>
    %c1_i32_12 = arith.constant 1 : i32
    %62 = vector.broadcast %c1_i32_12 : i32 to vector<1x512xi32>
    %63 = arith.cmpi sge, %8, %62 : vector<1x512xi32>
    %c1_i32_13 = arith.constant 1 : i32
    %64 = tpu.dynamic_rotate %0 by %c1_i32_13 dim 1 : vector<8x512xf32>, i32 -> vector<8x512xf32>
    %cst_14 = arith.constant 0.000000e+00 : f32
    %65 = vector.shape_cast %63 : vector<1x512xi1> to vector<1x512xi1>
    %66 = vector.broadcast %65 : vector<1x512xi1> to vector<8x512xi1>
    %67 = vector.broadcast %cst_14 : f32 to vector<8x512xf32>
    %68 = arith.select %66, %64, %67 : vector<8x512xi1>, vector<8x512xf32>
    %69 = vector.extract_strided_slice %1 {offsets = [0, 3], sizes = [8, 1], strides = [1, 1]} : vector<8x19xf32> to vector<8x1xf32>
    %70 = vector.extract_strided_slice %1 {offsets = [0, 12], sizes = [8, 1], strides = [1, 1]} : vector<8x19xf32> to vector<8x1xf32>
    %71 = vector.broadcast %69 : vector<8x1xf32> to vector<8x512xf32>
    %72 = arith.mulf %68, %71 : vector<8x512xf32>
    %73 = arith.addf %58, %72 : vector<8x512xf32>
    %74 = vector.broadcast %70 : vector<8x1xf32> to vector<8x512xf32>
    %75 = arith.mulf %68, %74 : vector<8x512xf32>
    %76 = arith.addf %61, %75 : vector<8x512xf32>
    %77 = vector.extract_strided_slice %1 {offsets = [0, 4], sizes = [8, 1], strides = [1, 1]} : vector<8x19xf32> to vector<8x1xf32>
    %78 = vector.extract_strided_slice %1 {offsets = [0, 13], sizes = [8, 1], strides = [1, 1]} : vector<8x19xf32> to vector<8x1xf32>
    %79 = vector.broadcast %77 : vector<8x1xf32> to vector<8x512xf32>
    %80 = arith.mulf %0, %79 : vector<8x512xf32>
    %81 = arith.addf %73, %80 : vector<8x512xf32>
    %82 = vector.broadcast %78 : vector<8x1xf32> to vector<8x512xf32>
    %83 = arith.mulf %0, %82 : vector<8x512xf32>
    %84 = arith.addf %76, %83 : vector<8x512xf32>
    %c15_i32_15 = arith.constant 15 : i32
    %85 = vector.broadcast %c15_i32_15 : i32 to vector<1x512xi32>
    %86 = arith.cmpi slt, %8, %85 : vector<1x512xi32>
    %c511_i32 = arith.constant 511 : i32
    %87 = tpu.dynamic_rotate %0 by %c511_i32 dim 1 : vector<8x512xf32>, i32 -> vector<8x512xf32>
    %cst_16 = arith.constant 0.000000e+00 : f32
    %88 = vector.shape_cast %86 : vector<1x512xi1> to vector<1x512xi1>
    %89 = vector.broadcast %88 : vector<1x512xi1> to vector<8x512xi1>
    %90 = vector.broadcast %cst_16 : f32 to vector<8x512xf32>
    %91 = arith.select %89, %87, %90 : vector<8x512xi1>, vector<8x512xf32>
    %92 = vector.extract_strided_slice %1 {offsets = [0, 5], sizes = [8, 1], strides = [1, 1]} : vector<8x19xf32> to vector<8x1xf32>
    %93 = vector.extract_strided_slice %1 {offsets = [0, 14], sizes = [8, 1], strides = [1, 1]} : vector<8x19xf32> to vector<8x1xf32>
    %94 = vector.broadcast %92 : vector<8x1xf32> to vector<8x512xf32>
    %95 = arith.mulf %91, %94 : vector<8x512xf32>
    %96 = arith.addf %81, %95 : vector<8x512xf32>
    %97 = vector.broadcast %93 : vector<8x1xf32> to vector<8x512xf32>
    %98 = arith.mulf %91, %97 : vector<8x512xf32>
    %99 = arith.addf %84, %98 : vector<8x512xf32>
    %c15_i32_17 = arith.constant 15 : i32
    %100 = vector.broadcast %c15_i32_17 : i32 to vector<1x512xi32>
    %101 = arith.cmpi slt, %6, %100 : vector<1x512xi32>
    %c1_i32_18 = arith.constant 1 : i32
    %102 = vector.broadcast %c1_i32_18 : i32 to vector<1x512xi32>
    %103 = arith.cmpi sge, %8, %102 : vector<1x512xi32>
    %104 = arith.andi %101, %103 : vector<1x512xi1>
    %c497_i32 = arith.constant 497 : i32
    %105 = tpu.dynamic_rotate %0 by %c497_i32 dim 1 : vector<8x512xf32>, i32 -> vector<8x512xf32>
    %cst_19 = arith.constant 0.000000e+00 : f32
    %106 = vector.shape_cast %104 : vector<1x512xi1> to vector<1x512xi1>
    %107 = vector.broadcast %106 : vector<1x512xi1> to vector<8x512xi1>
    %108 = vector.broadcast %cst_19 : f32 to vector<8x512xf32>
    %109 = arith.select %107, %105, %108 : vector<8x512xi1>, vector<8x512xf32>
    %110 = vector.extract_strided_slice %1 {offsets = [0, 6], sizes = [8, 1], strides = [1, 1]} : vector<8x19xf32> to vector<8x1xf32>
    %111 = vector.extract_strided_slice %1 {offsets = [0, 15], sizes = [8, 1], strides = [1, 1]} : vector<8x19xf32> to vector<8x1xf32>
    %112 = vector.broadcast %110 : vector<8x1xf32> to vector<8x512xf32>
    %113 = arith.mulf %109, %112 : vector<8x512xf32>
    %114 = arith.addf %96, %113 : vector<8x512xf32>
    %115 = vector.broadcast %111 : vector<8x1xf32> to vector<8x512xf32>
    %116 = arith.mulf %109, %115 : vector<8x512xf32>
    %117 = arith.addf %99, %116 : vector<8x512xf32>
    %c15_i32_20 = arith.constant 15 : i32
    %118 = vector.broadcast %c15_i32_20 : i32 to vector<1x512xi32>
    %119 = arith.cmpi slt, %6, %118 : vector<1x512xi32>
    %c496_i32 = arith.constant 496 : i32
    %120 = tpu.dynamic_rotate %0 by %c496_i32 dim 1 : vector<8x512xf32>, i32 -> vector<8x512xf32>
    %cst_21 = arith.constant 0.000000e+00 : f32
    %121 = vector.shape_cast %119 : vector<1x512xi1> to vector<1x512xi1>
    %122 = vector.broadcast %121 : vector<1x512xi1> to vector<8x512xi1>
    %123 = vector.broadcast %cst_21 : f32 to vector<8x512xf32>
    %124 = arith.select %122, %120, %123 : vector<8x512xi1>, vector<8x512xf32>
    %125 = vector.extract_strided_slice %1 {offsets = [0, 7], sizes = [8, 1], strides = [1, 1]} : vector<8x19xf32> to vector<8x1xf32>
    %126 = vector.extract_strided_slice %1 {offsets = [0, 16], sizes = [8, 1], strides = [1, 1]} : vector<8x19xf32> to vector<8x1xf32>
    %127 = vector.broadcast %125 : vector<8x1xf32> to vector<8x512xf32>
    %128 = arith.mulf %124, %127 : vector<8x512xf32>
    %129 = arith.addf %114, %128 : vector<8x512xf32>
    %130 = vector.broadcast %126 : vector<8x1xf32> to vector<8x512xf32>
    %131 = arith.mulf %124, %130 : vector<8x512xf32>
    %132 = arith.addf %117, %131 : vector<8x512xf32>
    %c15_i32_22 = arith.constant 15 : i32
    %133 = vector.broadcast %c15_i32_22 : i32 to vector<1x512xi32>
    %134 = arith.cmpi slt, %6, %133 : vector<1x512xi32>
    %c15_i32_23 = arith.constant 15 : i32
    %135 = vector.broadcast %c15_i32_23 : i32 to vector<1x512xi32>
    %136 = arith.cmpi slt, %8, %135 : vector<1x512xi32>
    %137 = arith.andi %134, %136 : vector<1x512xi1>
    %c495_i32 = arith.constant 495 : i32
    %138 = tpu.dynamic_rotate %0 by %c495_i32 dim 1 : vector<8x512xf32>, i32 -> vector<8x512xf32>
    %cst_24 = arith.constant 0.000000e+00 : f32
    %139 = vector.shape_cast %137 : vector<1x512xi1> to vector<1x512xi1>
    %140 = vector.broadcast %139 : vector<1x512xi1> to vector<8x512xi1>
    %141 = vector.broadcast %cst_24 : f32 to vector<8x512xf32>
    %142 = arith.select %140, %138, %141 : vector<8x512xi1>, vector<8x512xf32>
    %143 = vector.extract_strided_slice %1 {offsets = [0, 8], sizes = [8, 1], strides = [1, 1]} : vector<8x19xf32> to vector<8x1xf32>
    %144 = vector.extract_strided_slice %1 {offsets = [0, 17], sizes = [8, 1], strides = [1, 1]} : vector<8x19xf32> to vector<8x1xf32>
    %145 = vector.broadcast %143 : vector<8x1xf32> to vector<8x512xf32>
    %146 = arith.mulf %142, %145 : vector<8x512xf32>
    %147 = arith.addf %129, %146 : vector<8x512xf32>
    %148 = vector.broadcast %144 : vector<8x1xf32> to vector<8x512xf32>
    %149 = arith.mulf %142, %148 : vector<8x512xf32>
    %150 = arith.addf %132, %149 : vector<8x512xf32>
    %cst_25 = arith.constant dense<0.000000e+00> : vector<512xf32>
    %151 = vector.multi_reduction <add>, %147, %cst_25 [0] : vector<8x512xf32> to vector<512xf32>
    %152 = vector.shape_cast %151 : vector<512xf32> to vector<1x512xf32>
    %c0_26 = arith.constant 0 : index
    %153 = memref.load %arg3[%c0_26] : memref<2xf32, #tpu.memory_space<smem>>
    %154 = vector.broadcast %153 : f32 to vector<1x512xf32>
    %155 = arith.addf %152, %154 : vector<1x512xf32>
    %cst_27 = arith.constant dense<0.000000e+00> : vector<512xf32>
    %156 = vector.multi_reduction <add>, %150, %cst_27 [0] : vector<8x512xf32> to vector<512xf32>
    %157 = vector.shape_cast %156 : vector<512xf32> to vector<1x512xf32>
    %c1 = arith.constant 1 : index
    %158 = memref.load %arg3[%c1] : memref<2xf32, #tpu.memory_space<smem>>
    %159 = vector.broadcast %158 : f32 to vector<1x512xf32>
    %160 = arith.addf %157, %159 : vector<1x512xf32>
    %161 = arith.negf %155 : vector<1x512xf32>
    %162 = math.exp %161 : vector<1x512xf32>
    %cst_28 = arith.constant 1.000000e+00 : f32
    %163 = vector.broadcast %cst_28 : f32 to vector<1x512xf32>
    %164 = arith.addf %163, %162 : vector<1x512xf32>
    %165 = arith.divf %163, %164 : vector<1x512xf32>
    %166 = arith.negf %160 : vector<1x512xf32>
    %167 = math.exp %166 : vector<1x512xf32>
    %cst_29 = arith.constant 1.000000e+00 : f32
    %168 = vector.broadcast %cst_29 : f32 to vector<1x512xf32>
    %169 = arith.addf %168, %167 : vector<1x512xf32>
    %170 = arith.divf %168, %169 : vector<1x512xf32>
    %171 = vector.extract_strided_slice %1 {offsets = [0, 18], sizes = [8, 1], strides = [1, 1]} : vector<8x19xf32> to vector<8x1xf32>
    %172 = vector.broadcast %171 : vector<8x1xf32> to vector<8x512xf32>
    %173 = arith.mulf %0, %172 : vector<8x512xf32>
    %174 = vector.extract_strided_slice %173 {offsets = [0, 0], sizes = [4, 512], strides = [1, 1]} : vector<8x512xf32> to vector<4x512xf32>
    %175 = vector.broadcast %165 : vector<1x512xf32> to vector<4x512xf32>
    %176 = arith.mulf %175, %174 : vector<4x512xf32>
    %177 = vector.extract_strided_slice %173 {offsets = [4, 0], sizes = [4, 512], strides = [1, 1]} : vector<8x512xf32> to vector<4x512xf32>
    %178 = vector.broadcast %170 : vector<1x512xf32> to vector<4x512xf32>
    %179 = arith.mulf %178, %177 : vector<4x512xf32>
    %180 = arith.addf %176, %179 : vector<4x512xf32>
    %c0_30 = arith.constant 0 : index
    %c0_31 = arith.constant 0 : index
    %181 = vector.load %arg4[%c0_30, %c0_31] : memref<4x512xf32, #tpu.memory_space<vmem>>, vector<4x512xf32>
    tpu.vector_store %arg4[%c0_30, %c0_31], %180 {strides = array<i32>} : memref<4x512xf32, #tpu.memory_space<vmem>>, vector<4x512xf32>,
    return
  }
  func.func @transform_0(%arg0: i32) -> (i32, i32) {
    %c0_i32 = arith.constant 0 : i32
    %c0_i32_0 = arith.constant 0 : i32
    return %c0_i32, %arg0 : i32, i32
  }
  func.func @transform_1(%arg0: i32) -> (i32, i32) {
    %c0_i32 = arith.constant 0 : i32
    %c0_i32_0 = arith.constant 0 : i32
    %c0_i32_1 = arith.constant 0 : i32
    return %c0_i32, %c0_i32_0 : i32, i32
  }
  func.func @transform_2(%arg0: i32) -> i32 {
    %c0_i32 = arith.constant 0 : i32
    %c0_i32_0 = arith.constant 0 : i32
    return %c0_i32 : i32
  }
  func.func @transform_3(%arg0: i32) -> (i32, i32) {
    %c0_i32 = arith.constant 0 : i32
    %c0_i32_0 = arith.constant 0 : i32
    return %c0_i32, %arg0 : i32, i32
  }
}

</mosaic_0001>

<llo_original>
// kernel: tpu_custom_call.1
$region0: #{tpu_custom_call.1}
  #allocation0 [shape = 'u32[]', space=smem, size = 0x4, offset = 0x4, fixed_abs, tag = 'smem constant byte address 0x4 - core index']
  #allocation1 [shape = 'u32[144,128]{1,0:T(1,128)}', space=vmem, size = 0x12000, scoped, tag = 'internal scratch']
  %s0 = inlined_call_operand.hbm [shape: f32[8,512], index: 0, kind: input, shape index: {}]
  %s1 = inlined_call_operand.hbm [shape: f32[8,19], index: 1, kind: input, shape index: {}]
  %s2 = inlined_call_operand.vmem [shape: f32[2], index: 2, kind: input, shape index: {}]
  %s3 = inlined_call_operand.hbm [shape: f32[4,512], index: 3, kind: output, shape index: {}]
  %s4 = sld [smem:[#allocation0]]
  $region34: #{tpu_custom_call.1} parent=0
    _
  %s6 = ssub.s32 1, %s4
  %s7 = scalar_select 0, %s6, %s4
  $region1: #{tpu_custom_call.1} parent=0
    #allocation2 [shape = 'u8[16384]{0}', space=vmem, size = 0x4000, scoped, tag = 'input window, operand 0, single buffered']
    #allocation3 [shape = 's32[1]{0}', space=sflag, size = 0x4, scoped, tag = 'scoped memory for tpu_custom_call.1']
    #allocation4 [shape = 's32[1]{0}', space=sflag, size = 0x4, scoped, tag = 'scoped memory for tpu_custom_call.1']
    #allocation5 [shape = 's32[1]{0}', space=sflag, size = 0x4, scoped, tag = 'scoped memory for tpu_custom_call.1']
    #allocation6 [shape = 'u8[4096]{0}', space=vmem, size = 0x1000, scoped, tag = 'input window, operand 1, single buffered']
    #allocation7 [shape = 's32[1]{0}', space=sflag, size = 0x4, scoped, tag = 'scoped memory for tpu_custom_call.1']
    #allocation8 [shape = 'u8[512]{0}', space=smem, size = 0x200, scoped, tag = 'input window, operand 2, single buffered']
    #allocation9 [shape = 'u8[8192]{0}', space=vmem, size = 0x2000, scoped, tag = 'output window, operand 0, single buffered']
    %8 = vsyncpa [#allocation3], 0
    %9 = vsyncpa [#allocation7], 0
    %10 = vsyncpa [#allocation5], 0
    %11 = vsyncpa [#allocation4], 0
    // Predicated region
    $region2: #{tpu_custom_call.1} parent=1 // pred_check
      _
    $region3: #{tpu_custom_call.1} parent=1 // pred_check_branch
      %13 = sbr.rel (0) target = $region5
    $region4: #{tpu_custom_call.1} parent=1 // pred_region
      %s15 = ssub.s32 512, 512
      %16 = vsyncadd [#allocation3], %s15
      %s18 = sshll.u32 [#allocation2], 4
      %s19 = int_to_ptr.vmem [resolvable:$true] %s18
      %21 = dma.hbm_to_vmem [thread:$0]  %s0, 512, %s19, [#allocation3]
    $region5: #{tpu_custom_call.1} parent=1 // pred_fallthru
      _
    // Predicated region
    $region6: #{tpu_custom_call.1} parent=1 // pred_check
      _
    $region7: #{tpu_custom_call.1} parent=1 // pred_check_branch
      %23 = sbr.rel (0) target = $region9
    $region8: #{tpu_custom_call.1} parent=1 // pred_region
      %s25 = ssub.s32 128, 128
      %26 = vsyncadd [#allocation7], %s25
      %s28 = sshll.u32 [#allocation6], 4
      %s29 = int_to_ptr.vmem [resolvable:$true] %s28
      %31 = dma.hbm_to_vmem [thread:$0]  %s1, 128, %s29, [#allocation7]
    $region9: #{tpu_custom_call.1} parent=1 // pred_fallthru
      _
    // Predicated region
    $region10: #{tpu_custom_call.1} parent=1 // pred_check
      _
    $region11: #{tpu_custom_call.1} parent=1 // pred_check_branch
      %33 = sbr.rel (0) target = $region13
    $region12: #{tpu_custom_call.1} parent=1 // pred_region
      %s35 = ssub.s32 16, 16
      %36 = vsyncadd [#allocation5], %s35
      %s38 = sshll.u32 %s2, 4
      %s39 = int_to_ptr.vmem [resolvable:$true] %s38
      %41 = dma.vmem_to_smem %s39, 16, [#allocation8], [#allocation5]
    $region13: #{tpu_custom_call.1} parent=1 // pred_fallthru
      _
    // Predicated region
    $region14: #{tpu_custom_call.1} parent=1 // pred_check
      _
    $region15: #{tpu_custom_call.1} parent=1 // pred_check_branch
      %43 = sbr.rel (0) target = $region17
    $region16: #{tpu_custom_call.1} parent=1 // pred_region
      %44 = dma.done [#allocation3], 512
    $region17: #{tpu_custom_call.1} parent=1 // pred_fallthru
      _
    // Predicated region
    $region18: #{tpu_custom_call.1} parent=1 // pred_check
      _
    $region19: #{tpu_custom_call.1} parent=1 // pred_check_branch
      %46 = sbr.rel (0) target = $region21
    $region20: #{tpu_custom_call.1} parent=1 // pred_region
      %47 = dma.done [#allocation7], 128
    $region21: #{tpu_custom_call.1} parent=1 // pred_fallthru
      _
    // Predicated region
    $region22: #{tpu_custom_call.1} parent=1 // pred_check
      _
    $region23: #{tpu_custom_call.1} parent=1 // pred_check_branch
      %49 = sbr.rel (0) target = $region25
    $region24: #{tpu_custom_call.1} parent=1 // pred_region
      %50 = dma.done [#allocation5], 16
    $region25: #{tpu_custom_call.1} parent=1 // pred_fallthru
      _
    %51 = sfence
    %v52 = vld [vmem:[#allocation2] sm:$0xff]
    %v53 = vld [vmem:[#allocation2 + $0x8] sm:$0xff]
    %v54 = vld [vmem:[#allocation2 + $0x10] sm:$0xff]
    %v55 = vld [vmem:[#allocation2 + $0x18] sm:$0xff]
    %v56 = vld [vmem:[#allocation6] sm:$0xff]
    %v57 = vlaneseq
    %v58 = vand.u32 %v57, 127
    %v59 = vadd.s32 %v58, 128
    %v60 = vadd.s32 %v58, 256
    %v61 = vadd.s32 %v58, 384
    %v62 = vand.u32 %v58, 255
    %v63 = vand.u32 %v59, 255
    %v64 = vand.u32 %v60, 255
    %v65 = vand.u32 %v61, 255
    %v66 = vshra.s32 %v62, 4
    %v67 = vshra.s32 %v63, 4
    %v68 = vshra.s32 %v64, 4
    %v69 = vshra.s32 %v65, 4
    %v70 = vand.u32 %v62, 15
    %v71 = vand.u32 %v63, 15
    %v72 = vand.u32 %v64, 15
    %v73 = vand.u32 %v65, 15
    %vm74 = vcmp.ge.s32.totalorder %v66, 1
    %vm75 = vcmp.ge.s32.totalorder %v67, 1
    %vm76 = vcmp.ge.s32.totalorder %v68, 1
    %vm77 = vcmp.ge.s32.totalorder %v69, 1
    %vm78 = vcmp.ge.s32.totalorder %v70, 1
    %vm79 = vcmp.ge.s32.totalorder %v71, 1
    %vm80 = vcmp.ge.s32.totalorder %v72, 1
    %vm81 = vcmp.ge.s32.totalorder %v73, 1
    %vm82 = vmand %vm74, %vm78
    %vm83 = vmand %vm75, %vm79
    %vm84 = vmand %vm76, %vm80
    %vm85 = vmand %vm77, %vm81
    %86 = vrot.lane.b32.xlu0 %v52, 17
    %v87 = vpop.permute.xlu0 %86
    %88 = vrot.lane.b32.xlu0 %v53, 17
    %v89 = vpop.permute.xlu0 %88
    %90 = vrot.lane.b32.xlu0 %v54, 17
    %v91 = vpop.permute.xlu0 %90
    %92 = vrot.lane.b32.xlu0 %v55, 17
    %v93 = vpop.permute.xlu0 %92
    %vm94 = vcmp.lt.s32.totalorder %v58, 17
    %v95 = vsel %vm94, %v91, %v93
    %v96 = vsel %vm94, %v89, %v91
    %v97 = vsel %vm94, %v87, %v89
    %v98 = vsel %vm94, %v93, %v87
    %v99 = vsel %vm82, 1, 0
    %v100 = vsel %vm83, 1, 0
    %v101 = vsel %vm84, 1, 0
    %v102 = vsel %vm85, 1, 0
    %vm103 = vcmp.eq.s32.totalorder %v99, 1
    %vm104 = vcmp.eq.s32.totalorder %v100, 1
    %vm105 = vcmp.eq.s32.totalorder %v101, 1
    %vm106 = vcmp.eq.s32.totalorder %v102, 1
    %v107 = vsel %vm103, %v98, 0.0
    %v108 = vsel %vm104, %v97, 0.0
    %v109 = vsel %vm105, %v96, 0.0
    %v110 = vsel %vm106, %v95, 0.0
    %112 = vset.pattern.permute.xlu0 0
    %113 = vperm.xlu0 %112, %v56
    %v114 = vpop.permute.xlu0 %113
    %v116 = vmul.f32 %v107, %v114
    %v117 = vmul.f32 %v108, %v114
    %v118 = vmul.f32 %v109, %v114
    %v119 = vmul.f32 %v110, %v114
    %v120 = vadd.f32 %v116, 0.0
    %v121 = vadd.f32 %v117, 0.0
    %v122 = vadd.f32 %v118, 0.0
    %v123 = vadd.f32 %v119, 0.0
    %124 = vset.pattern.permute.xlu0 9
    %125 = vperm.xlu0 %124, %v56
    %v126 = vpop.permute.xlu0 %125
    %v128 = vmul.f32 %v107, %v126
    %v129 = vmul.f32 %v108, %v126
    %v130 = vmul.f32 %v109, %v126
    %v131 = vmul.f32 %v110, %v126
    %v132 = vadd.f32 %v128, 0.0
    %v133 = vadd.f32 %v129, 0.0
    %v134 = vadd.f32 %v130, 0.0
    %v135 = vadd.f32 %v131, 0.0
    %136 = vrot.lane.b32.xlu0 %v52, 16
    %v137 = vpop.permute.xlu0 %136
    %138 = vrot.lane.b32.xlu0 %v53, 16
    %v139 = vpop.permute.xlu0 %138
    %140 = vrot.lane.b32.xlu0 %v54, 16
    %v141 = vpop.permute.xlu0 %140
    %142 = vrot.lane.b32.xlu0 %v55, 16
    %v143 = vpop.permute.xlu0 %142
    %vm144 = vcmp.lt.s32.totalorder %v58, 16
    %v145 = vsel %vm144, %v141, %v143
    %v146 = vsel %vm144, %v139, %v141
    %v147 = vsel %vm144, %v137, %v139
    %v148 = vsel %vm144, %v143, %v137
    %v149 = vsel %vm74, 1, 0
    %v150 = vsel %vm75, 1, 0
    %v151 = vsel %vm76, 1, 0
    %v152 = vsel %vm77, 1, 0
    %vm153 = vcmp.eq.s32.totalorder %v149, 1
    %vm154 = vcmp.eq.s32.totalorder %v150, 1
    %vm155 = vcmp.eq.s32.totalorder %v151, 1
    %vm156 = vcmp.eq.s32.totalorder %v152, 1
    %v157 = vsel %vm153, %v148, 0.0
    %v158 = vsel %vm154, %v147, 0.0
    %v159 = vsel %vm155, %v146, 0.0
    %v160 = vsel %vm156, %v145, 0.0
    %161 = vset.pattern.permute.xlu0 1
    %162 = vperm.xlu0 %161, %v56
    %v163 = vpop.permute.xlu0 %162
    %v165 = vmul.f32 %v157, %v163
    %v166 = vmul.f32 %v158, %v163
    %v167 = vmul.f32 %v159, %v163
    %v168 = vmul.f32 %v160, %v163
    %v169 = vadd.f32 %v120, %v165
    %v170 = vadd.f32 %v121, %v166
    %v171 = vadd.f32 %v122, %v167
    %v172 = vadd.f32 %v123, %v168
    %173 = vset.pattern.permute.xlu0 10
    %174 = vperm.xlu0 %173, %v56
    %v175 = vpop.permute.xlu0 %174
    %v177 = vmul.f32 %v157, %v175
    %v178 = vmul.f32 %v158, %v175
    %v179 = vmul.f32 %v159, %v175
    %v180 = vmul.f32 %v160, %v175
    %v181 = vadd.f32 %v132, %v177
    %v182 = vadd.f32 %v133, %v178
    %v183 = vadd.f32 %v134, %v179
    %v184 = vadd.f32 %v135, %v180
    %vm185 = vcmp.lt.s32.totalorder %v70, 15
    %vm186 = vcmp.lt.s32.totalorder %v71, 15
    %vm187 = vcmp.lt.s32.totalorder %v72, 15
    %vm188 = vcmp.lt.s32.totalorder %v73, 15
    %vm189 = vmand %vm74, %vm185
    %vm190 = vmand %vm75, %vm186
    %vm191 = vmand %vm76, %vm187
    %vm192 = vmand %vm77, %vm188
    %193 = vrot.lane.b32.xlu0 %v52, 15
    %v194 = vpop.permute.xlu0 %193
    %195 = vrot.lane.b32.xlu0 %v53, 15
    %v196 = vpop.permute.xlu0 %195
    %197 = vrot.lane.b32.xlu0 %v54, 15
    %v198 = vpop.permute.xlu0 %197
    %199 = vrot.lane.b32.xlu0 %v55, 15
    %v200 = vpop.permute.xlu0 %199
    %vm201 = vcmp.lt.s32.totalorder %v58, 15
    %v202 = vsel %vm201, %v198, %v200
    %v203 = vsel %vm201, %v196, %v198
    %v204 = vsel %vm201, %v194, %v196
    %v205 = vsel %vm201, %v200, %v194
    %v206 = vsel %vm189, 1, 0
    %v207 = vsel %vm190, 1, 0
    %v208 = vsel %vm191, 1, 0
    %v209 = vsel %vm192, 1, 0
    %vm210 = vcmp.eq.s32.totalorder %v206, 1
    %vm211 = vcmp.eq.s32.totalorder %v207, 1
    %vm212 = vcmp.eq.s32.totalorder %v208, 1
    %vm213 = vcmp.eq.s32.totalorder %v209, 1
    %v214 = vsel %vm210, %v205, 0.0
    %v215 = vsel %vm211, %v204, 0.0
    %v216 = vsel %vm212, %v203, 0.0
    %v217 = vsel %vm213, %v202, 0.0
    %218 = vset.pattern.permute.xlu0 2
    %219 = vperm.xlu0 %218, %v56
    %v220 = vpop.permute.xlu0 %219
    %v222 = vmul.f32 %v214, %v220
    %v223 = vmul.f32 %v215, %v220
    %v224 = vmul.f32 %v216, %v220
    %v225 = vmul.f32 %v217, %v220
    %v226 = vadd.f32 %v169, %v222
    %v227 = vadd.f32 %v170, %v223
    %v228 = vadd.f32 %v171, %v224
    %v229 = vadd.f32 %v172, %v225
    %230 = vset.pattern.permute.xlu0 11
    %231 = vperm.xlu0 %230, %v56
    %v232 = vpop.permute.xlu0 %231
    %v234 = vmul.f32 %v214, %v232
    %v235 = vmul.f32 %v215, %v232
    %v236 = vmul.f32 %v216, %v232
    %v237 = vmul.f32 %v217, %v232
    %v238 = vadd.f32 %v181, %v234
    %v239 = vadd.f32 %v182, %v235
    %v240 = vadd.f32 %v183, %v236
    %v241 = vadd.f32 %v184, %v237
    %242 = vrot.lane.b32.xlu0 %v52, 1
    %v243 = vpop.permute.xlu0 %242
    %244 = vrot.lane.b32.xlu0 %v53, 1
    %v245 = vpop.permute.xlu0 %244
    %246 = vrot.lane.b32.xlu0 %v54, 1
    %v247 = vpop.permute.xlu0 %246
    %248 = vrot.lane.b32.xlu0 %v55, 1
    %v249 = vpop.permute.xlu0 %248
    %vm250 = vcmp.lt.s32.totalorder %v58, 1
    %v251 = vsel %vm250, %v247, %v249
    %v252 = vsel %vm250, %v245, %v247
    %v253 = vsel %vm250, %v243, %v245
    %v254 = vsel %vm250, %v249, %v243
    %v255 = vsel %vm78, 1, 0
    %v256 = vsel %vm79, 1, 0
    %v257 = vsel %vm80, 1, 0
    %v258 = vsel %vm81, 1, 0
    %vm259 = vcmp.eq.s32.totalorder %v255, 1
    %vm260 = vcmp.eq.s32.totalorder %v256, 1
    %vm261 = vcmp.eq.s32.totalorder %v257, 1
    %vm262 = vcmp.eq.s32.totalorder %v258, 1
    %v263 = vsel %vm259, %v254, 0.0
    %v264 = vsel %vm260, %v253, 0.0
    %v265 = vsel %vm261, %v252, 0.0
    %v266 = vsel %vm262, %v251, 0.0
    %267 = vset.pattern.permute.xlu0 3
    %268 = vperm.xlu0 %267, %v56
    %v269 = vpop.permute.xlu0 %268
    %v271 = vmul.f32 %v263, %v269
    %v272 = vmul.f32 %v264, %v269
    %v273 = vmul.f32 %v265, %v269
    %v274 = vmul.f32 %v266, %v269
    %v275 = vadd.f32 %v226, %v271
    %v276 = vadd.f32 %v227, %v272
    %v277 = vadd.f32 %v228, %v273
    %v278 = vadd.f32 %v229, %v274
    %279 = vset.pattern.permute.xlu0 12
    %280 = vperm.xlu0 %279, %v56
    %v281 = vpop.permute.xlu0 %280
    %v283 = vmul.f32 %v263, %v281
    %v284 = vmul.f32 %v264, %v281
    %v285 = vmul.f32 %v265, %v281
    %v286 = vmul.f32 %v266, %v281
    %v287 = vadd.f32 %v238, %v283
    %v288 = vadd.f32 %v239, %v284
    %v289 = vadd.f32 %v240, %v285
    %v290 = vadd.f32 %v241, %v286
    %291 = vset.pattern.permute.xlu0 4
    %292 = vperm.xlu0 %291, %v56
    %v293 = vpop.permute.xlu0 %292
    %v295 = vmul.f32 %v52, %v293
    %v296 = vmul.f32 %v53, %v293
    %v297 = vmul.f32 %v54, %v293
    %v298 = vmul.f32 %v55, %v293
    %v299 = vadd.f32 %v275, %v295
    %v300 = vadd.f32 %v276, %v296
    %v301 = vadd.f32 %v277, %v297
    %v302 = vadd.f32 %v278, %v298
    %303 = vset.pattern.permute.xlu0 13
    %304 = vperm.xlu0 %303, %v56
    %v305 = vpop.permute.xlu0 %304
    %v307 = vmul.f32 %v52, %v305
    %v308 = vmul.f32 %v53, %v305
    %v309 = vmul.f32 %v54, %v305
    %v310 = vmul.f32 %v55, %v305
    %v311 = vadd.f32 %v287, %v307
    %v312 = vadd.f32 %v288, %v308
    %v313 = vadd.f32 %v289, %v309
    %v314 = vadd.f32 %v290, %v310
    %315 = vrot.lane.b32.xlu0 %v52, 127
    %v316 = vpop.permute.xlu0 %315
    %317 = vrot.lane.b32.xlu0 %v53, 127
    %v318 = vpop.permute.xlu0 %317
    %319 = vrot.lane.b32.xlu0 %v54, 127
    %v320 = vpop.permute.xlu0 %319
    %321 = vrot.lane.b32.xlu0 %v55, 127
    %v322 = vpop.permute.xlu0 %321
    %vm323 = vcmp.lt.s32.totalorder %v58, 127
    %v324 = vsel %vm323, %v320, %v322
    %v325 = vsel %vm323, %v318, %v320
    %v326 = vsel %vm323, %v316, %v318
    %v327 = vsel %vm323, %v322, %v316
    %v328 = vsel %vm185, 1, 0
    %v329 = vsel %vm186, 1, 0
    %v330 = vsel %vm187, 1, 0
    %v331 = vsel %vm188, 1, 0
    %vm332 = vcmp.eq.s32.totalorder %v328, 1
    %vm333 = vcmp.eq.s32.totalorder %v329, 1
    %vm334 = vcmp.eq.s32.totalorder %v330, 1
    %vm335 = vcmp.eq.s32.totalorder %v331, 1
    %v336 = vsel %vm332, %v326, 0.0
    %v337 = vsel %vm333, %v325, 0.0
    %v338 = vsel %vm334, %v324, 0.0
    %v339 = vsel %vm335, %v327, 0.0
    %340 = vset.pattern.permute.xlu0 5
    %341 = vperm.xlu0 %340, %v56
    %v342 = vpop.permute.xlu0 %341
    %v344 = vmul.f32 %v336, %v342
    %v345 = vmul.f32 %v337, %v342
    %v346 = vmul.f32 %v338, %v342
    %v347 = vmul.f32 %v339, %v342
    %v348 = vadd.f32 %v299, %v344
    %v349 = vadd.f32 %v300, %v345
    %v350 = vadd.f32 %v301, %v346
    %v351 = vadd.f32 %v302, %v347
    %352 = vset.pattern.permute.xlu0 14
    %353 = vperm.xlu0 %352, %v56
    %v354 = vpop.permute.xlu0 %353
    %v356 = vmul.f32 %v336, %v354
    %v357 = vmul.f32 %v337, %v354
    %v358 = vmul.f32 %v338, %v354
    %v359 = vmul.f32 %v339, %v354
    %v360 = vadd.f32 %v311, %v356
    %v361 = vadd.f32 %v312, %v357
    %v362 = vadd.f32 %v313, %v358
    %v363 = vadd.f32 %v314, %v359
    %vm364 = vcmp.lt.s32.totalorder %v66, 15
    %vm365 = vcmp.lt.s32.totalorder %v67, 15
    %vm366 = vcmp.lt.s32.totalorder %v68, 15
    %vm367 = vcmp.lt.s32.totalorder %v69, 15
    %vm368 = vmand %vm364, %vm78
    %vm369 = vmand %vm365, %vm79
    %vm370 = vmand %vm366, %vm80
    %vm371 = vmand %vm367, %vm81
    %372 = vrot.lane.b32.xlu0 %v52, 113
    %v373 = vpop.permute.xlu0 %372
    %374 = vrot.lane.b32.xlu0 %v53, 113
    %v375 = vpop.permute.xlu0 %374
    %376 = vrot.lane.b32.xlu0 %v54, 113
    %v377 = vpop.permute.xlu0 %376
    %378 = vrot.lane.b32.xlu0 %v55, 113
    %v379 = vpop.permute.xlu0 %378
    %vm380 = vcmp.lt.s32.totalorder %v58, 113
    %v381 = vsel %vm380, %v377, %v379
    %v382 = vsel %vm380, %v375, %v377
    %v383 = vsel %vm380, %v373, %v375
    %v384 = vsel %vm380, %v379, %v373
    %v385 = vsel %vm368, 1, 0
    %v386 = vsel %vm369, 1, 0
    %v387 = vsel %vm370, 1, 0
    %v388 = vsel %vm371, 1, 0
    %vm389 = vcmp.eq.s32.totalorder %v385, 1
    %vm390 = vcmp.eq.s32.totalorder %v386, 1
    %vm391 = vcmp.eq.s32.totalorder %v387, 1
    %vm392 = vcmp.eq.s32.totalorder %v388, 1
    %v393 = vsel %vm389, %v383, 0.0
    %v394 = vsel %vm390, %v382, 0.0
    %v395 = vsel %vm391, %v381, 0.0
    %v396 = vsel %vm392, %v384, 0.0
    %397 = vset.pattern.permute.xlu0 6
    %398 = vperm.xlu0 %397, %v56
    %v399 = vpop.permute.xlu0 %398
    %v401 = vmul.f32 %v393, %v399
    %v402 = vmul.f32 %v394, %v399
    %v403 = vmul.f32 %v395, %v399
    %v404 = vmul.f32 %v396, %v399
    %v405 = vadd.f32 %v348, %v401
    %v406 = vadd.f32 %v349, %v402
    %v407 = vadd.f32 %v350, %v403
    %v408 = vadd.f32 %v351, %v404
    %409 = vset.pattern.permute.xlu0 15
    %410 = vperm.xlu0 %409, %v56
    %v411 = vpop.permute.xlu0 %410
    %v413 = vmul.f32 %v393, %v411
    %v414 = vmul.f32 %v394, %v411
    %v415 = vmul.f32 %v395, %v411
    %v416 = vmul.f32 %v396, %v411
    %v417 = vadd.f32 %v360, %v413
    %v418 = vadd.f32 %v361, %v414
    %v419 = vadd.f32 %v362, %v415
    %v420 = vadd.f32 %v363, %v416
    %421 = vrot.lane.b32.xlu0 %v52, 112
    %v422 = vpop.permute.xlu0 %421
    %423 = vrot.lane.b32.xlu0 %v53, 112
    %v424 = vpop.permute.xlu0 %423
    %425 = vrot.lane.b32.xlu0 %v54, 112
    %v426 = vpop.permute.xlu0 %425
    %427 = vrot.lane.b32.xlu0 %v55, 112
    %v428 = vpop.permute.xlu0 %427
    %vm429 = vcmp.lt.s32.totalorder %v58, 112
    %v430 = vsel %vm429, %v426, %v428
    %v431 = vsel %vm429, %v424, %v426
    %v432 = vsel %vm429, %v422, %v424
    %v433 = vsel %vm429, %v428, %v422
    %v434 = vsel %vm364, 1, 0
    %v435 = vsel %vm365, 1, 0
    %v436 = vsel %vm366, 1, 0
    %v437 = vsel %vm367, 1, 0
    %vm438 = vcmp.eq.s32.totalorder %v434, 1
    %vm439 = vcmp.eq.s32.totalorder %v435, 1
    %vm440 = vcmp.eq.s32.totalorder %v436, 1
    %vm441 = vcmp.eq.s32.totalorder %v437, 1
    %v442 = vsel %vm438, %v432, 0.0
    %v443 = vsel %vm439, %v431, 0.0
    %v444 = vsel %vm440, %v430, 0.0
    %v445 = vsel %vm441, %v433, 0.0
    %446 = vset.pattern.permute.xlu0 7
    %447 = vperm.xlu0 %446, %v56
    %v448 = vpop.permute.xlu0 %447
    %v450 = vmul.f32 %v442, %v448
    %v451 = vmul.f32 %v443, %v448
    %v452 = vmul.f32 %v444, %v448
    %v453 = vmul.f32 %v445, %v448
    %v454 = vadd.f32 %v405, %v450
    %v455 = vadd.f32 %v406, %v451
    %v456 = vadd.f32 %v407, %v452
    %v457 = vadd.f32 %v408, %v453
    %458 = vset.pattern.permute.xlu0 16
    %459 = vperm.xlu0 %458, %v56
    %v460 = vpop.permute.xlu0 %459
    %v462 = vmul.f32 %v442, %v460
    %v463 = vmul.f32 %v443, %v460
    %v464 = vmul.f32 %v444, %v460
    %v465 = vmul.f32 %v445, %v460
    %v466 = vadd.f32 %v417, %v462
    %v467 = vadd.f32 %v418, %v463
    %v468 = vadd.f32 %v419, %v464
    %v469 = vadd.f32 %v420, %v465
    %vm470 = vmand %vm364, %vm185
    %vm471 = vmand %vm365, %vm186
    %vm472 = vmand %vm366, %vm187
    %vm473 = vmand %vm367, %vm188
    %474 = vrot.lane.b32.xlu0 %v52, 111
    %v475 = vpop.permute.xlu0 %474
    %476 = vrot.lane.b32.xlu0 %v53, 111
    %v477 = vpop.permute.xlu0 %476
    %478 = vrot.lane.b32.xlu0 %v54, 111
    %v479 = vpop.permute.xlu0 %478
    %480 = vrot.lane.b32.xlu0 %v55, 111
    %v481 = vpop.permute.xlu0 %480
    %vm482 = vcmp.lt.s32.totalorder %v58, 111
    %v483 = vsel %vm482, %v479, %v481
    %v484 = vsel %vm482, %v477, %v479
    %v485 = vsel %vm482, %v475, %v477
    %v486 = vsel %vm482, %v481, %v475
    %v487 = vsel %vm470, 1, 0
    %v488 = vsel %vm471, 1, 0
    %v489 = vsel %vm472, 1, 0
    %v490 = vsel %vm473, 1, 0
    %vm491 = vcmp.eq.s32.totalorder %v487, 1
    %vm492 = vcmp.eq.s32.totalorder %v488, 1
    %vm493 = vcmp.eq.s32.totalorder %v489, 1
    %vm494 = vcmp.eq.s32.totalorder %v490, 1
    %v495 = vsel %vm491, %v485, 0.0
    %v496 = vsel %vm492, %v484, 0.0
    %v497 = vsel %vm493, %v483, 0.0
    %v498 = vsel %vm494, %v486, 0.0
    %499 = vset.pattern.permute.xlu0 8
    %500 = vperm.xlu0 %499, %v56
    %v501 = vpop.permute.xlu0 %500
    %v503 = vmul.f32 %v495, %v501
    %v504 = vmul.f32 %v496, %v501
    %v505 = vmul.f32 %v497, %v501
    %v506 = vmul.f32 %v498, %v501
    %v507 = vadd.f32 %v454, %v503
    %v508 = vadd.f32 %v455, %v504
    %v509 = vadd.f32 %v456, %v505
    %v510 = vadd.f32 %v457, %v506
    %511 = vset.pattern.permute.xlu0 17
    %512 = vperm.xlu0 %511, %v56
    %v513 = vpop.permute.xlu0 %512
    %v515 = vmul.f32 %v495, %v513
    %v516 = vmul.f32 %v496, %v513
    %v517 = vmul.f32 %v497, %v513
    %v518 = vmul.f32 %v498, %v513
    %v519 = vadd.f32 %v466, %v515
    %v520 = vadd.f32 %v467, %v516
    %v521 = vadd.f32 %v468, %v517
    %v522 = vadd.f32 %v469, %v518
    %v523 = vrot.slane %v507, 4
    %v524 = vadd.f32 %v507, %v523
    %v525 = vrot.slane %v524, 2
    %v526 = vadd.f32 %v524, %v525
    %v527 = vrot.slane %v526, 1
    %v528 = vadd.f32 %v526, %v527
    %v529 = vrot.slane %v508, 4
    %v530 = vadd.f32 %v508, %v529
    %v531 = vrot.slane %v530, 2
    %v532 = vadd.f32 %v530, %v531
    %v533 = vrot.slane %v532, 1
    %v534 = vadd.f32 %v532, %v533
    %v535 = vrot.slane %v509, 4
    %v536 = vadd.f32 %v509, %v535
    %v537 = vrot.slane %v536, 2
    %v538 = vadd.f32 %v536, %v537
    %v539 = vrot.slane %v538, 1
    %v540 = vadd.f32 %v538, %v539
    %v541 = vrot.slane %v510, 4
    %v542 = vadd.f32 %v510, %v541
    %v543 = vrot.slane %v542, 2
    %v544 = vadd.f32 %v542, %v543
    %v545 = vrot.slane %v544, 1
    %v546 = vadd.f32 %v544, %v545
    %s547 = sld [smem:[#allocation8]]
    %v548 = vstv %s547
    %v549 = vadd.f32 %v528, %v548
    %v550 = vadd.f32 %v534, %v548
    %v551 = vadd.f32 %v540, %v548
    %v552 = vadd.f32 %v546, %v548
    %v553 = vrot.slane %v519, 4
    %v554 = vadd.f32 %v519, %v553
    %v555 = vrot.slane %v554, 2
    %v556 = vadd.f32 %v554, %v555
    %v557 = vrot.slane %v556, 1
    %v558 = vadd.f32 %v556, %v557
    %v559 = vrot.slane %v520, 4
    %v560 = vadd.f32 %v520, %v559
    %v561 = vrot.slane %v560, 2
    %v562 = vadd.f32 %v560, %v561
    %v563 = vrot.slane %v562, 1
    %v564 = vadd.f32 %v562, %v563
    %v565 = vrot.slane %v521, 4
    %v566 = vadd.f32 %v521, %v565
    %v567 = vrot.slane %v566, 2
    %v568 = vadd.f32 %v566, %v567
    %v569 = vrot.slane %v568, 1
    %v570 = vadd.f32 %v568, %v569
    %v571 = vrot.slane %v522, 4
    %v572 = vadd.f32 %v522, %v571
    %v573 = vrot.slane %v572, 2
    %v574 = vadd.f32 %v572, %v573
    %v575 = vrot.slane %v574, 1
    %v576 = vadd.f32 %v574, %v575
    %s577 = sld [smem:[#allocation8 + $0x1]]
    %v578 = vstv %s577
    %v579 = vadd.f32 %v558, %v578
    %v580 = vadd.f32 %v564, %v578
    %v581 = vadd.f32 %v570, %v578
    %v582 = vadd.f32 %v576, %v578
    %v583 = vxor.u32 %v549, 2147483648
    %v584 = vxor.u32 %v550, 2147483648
    %v585 = vxor.u32 %v551, 2147483648
    %v586 = vxor.u32 %v552, 2147483648
    %v587 = vmul.f32 %v583, 1.442695
    %v588 = vpow.pop %v587
    %v589 = vmul.f32 %v584, 1.442695
    %v590 = vpow.pop %v589
    %v591 = vmul.f32 %v585, 1.442695
    %v592 = vpow.pop %v591
    %v593 = vmul.f32 %v586, 1.442695
    %v594 = vpow.pop %v593
    %v595 = vadd.f32 %v588, 1.0
    %v596 = vadd.f32 %v590, 1.0
    %v597 = vadd.f32 %v592, 1.0
    %v598 = vadd.f32 %v594, 1.0
    %v599 = vrcp.pop %v595
    %v600 = vmul.f32 1.0, %v599
    %v601 = vrcp.pop %v596
    %v602 = vmul.f32 1.0, %v601
    %v603 = vrcp.pop %v597
    %v604 = vmul.f32 1.0, %v603
    %v605 = vrcp.pop %v598
    %v606 = vmul.f32 1.0, %v605
    %v607 = vxor.u32 %v579, 2147483648
    %v608 = vxor.u32 %v580, 2147483648
    %v609 = vxor.u32 %v581, 2147483648
    %v610 = vxor.u32 %v582, 2147483648
    %v611 = vmul.f32 %v607, 1.442695
    %v612 = vpow.pop %v611
    %v613 = vmul.f32 %v608, 1.442695
    %v614 = vpow.pop %v613
    %v615 = vmul.f32 %v609, 1.442695
    %v616 = vpow.pop %v615
    %v617 = vmul.f32 %v610, 1.442695
    %v618 = vpow.pop %v617
    %v619 = vadd.f32 %v612, 1.0
    %v620 = vadd.f32 %v614, 1.0
    %v621 = vadd.f32 %v616, 1.0
    %v622 = vadd.f32 %v618, 1.0
    %v623 = vrcp.pop %v619
    %v624 = vmul.f32 1.0, %v623
    %v625 = vrcp.pop %v620
    %v626 = vmul.f32 1.0, %v625
    %v627 = vrcp.pop %v621
    %v628 = vmul.f32 1.0, %v627
    %v629 = vrcp.pop %v622
    %v630 = vmul.f32 1.0, %v629
    %631 = vset.pattern.permute.xlu0 18
    %632 = vperm.xlu0 %631, %v56
    %v633 = vpop.permute.xlu0 %632
    %v635 = vmul.f32 %v52, %v633
    %v636 = vmul.f32 %v53, %v633
    %v637 = vmul.f32 %v54, %v633
    %v638 = vmul.f32 %v55, %v633
    %v639 = vmul.f32 %v600, %v635
    %v640 = vmul.f32 %v602, %v636
    %v641 = vmul.f32 %v604, %v637
    %v642 = vmul.f32 %v606, %v638
    %v643 = vmul.f32 %v624, %v635
    %v644 = vmul.f32 %v626, %v636
    %v645 = vmul.f32 %v628, %v637
    %v646 = vmul.f32 %v630, %v638
    %v651 = vrot.slane %v643, 4
    %v652 = vrot.slane %v644, 4
    %v653 = vrot.slane %v645, 4
    %v654 = vrot.slane %v646, 4
    %v659 = vadd.f32 %v639, %v651
    %v660 = vadd.f32 %v640, %v652
    %v661 = vadd.f32 %v641, %v653
    %v662 = vadd.f32 %v642, %v654
    %v667 = vcombine.low %v659, %v660
    %v668 = vcombine.low %v661, %v662
    %671 = vst [vmem:[#allocation9] sm:$0xff] %v667
    %672 = vst [vmem:[#allocation9 + $0x8] sm:$0xff] %v668
    // Predicated region
    $region26: #{tpu_custom_call.1} parent=1 // pred_check
      _
    $region27: #{tpu_custom_call.1} parent=1 // pred_check_branch
      %674 = sbr.rel (0) target = $region29
    $region28: #{tpu_custom_call.1} parent=1 // pred_region
      %s676 = ssub.s32 256, 256
      %677 = vsyncadd [#allocation4], %s676
      %s679 = sshll.u32 [#allocation9], 4
      %s680 = int_to_ptr.vmem [resolvable:$true] %s679
      %682 = dma.vmem_to_hbm [thread:$0]  %s680, 256, %s3, [#allocation4]
    $region29: #{tpu_custom_call.1} parent=1 // pred_fallthru
      _
    // Predicated region
    $region30: #{tpu_custom_call.1} parent=1 // pred_check
      _
    $region31: #{tpu_custom_call.1} parent=1 // pred_check_branch
      %684 = sbr.rel (0) target = $region33
    $region32: #{tpu_custom_call.1} parent=1 // pred_region
      %685 = dma.done [#allocation4], 256
    $region33: #{tpu_custom_call.1} parent=1 // pred_fallthru
      _
    %686 = vsyncpa [#allocation3], 1
    %687 = vsyncpa [#allocation7], 1
    %688 = vsyncpa [#allocation4], 1
    %689 = vsyncpa [#allocation5], 1

</llo_original>
